<compile_context>
chip_gen: v7x
topology: tpu7x:2x2x1
jax: 0.10.0
libtpu: 0.0.40
codegen_flags: <defaults>
</compile_context>

<pallas_src>
import functools

import jax
import jax.numpy as jnp
import numpy as np
from jax.experimental import pallas as pl
from jax.experimental.pallas import tpu as pltpu


def _pair_cost_kernel(pred_ref, embs_t_ref, w_l2v_ref, w_v2l_ref, g_den_ref,
                      invt_ref, out_l2v_ref, out_v2l_ref, *, batch_size):
    """Grid step j: costs of prediction block j against ALL captions at once.

    pred_ref   : (1, Q, D)  VMEM  prediction block j (double-buffered)
    embs_t_ref : (D, B*T)   VMEM  all caption noun embeddings, resident
    w_l2v_ref  : (B*T, B)   VMEM  one-hot caption groups * mask * (-1/temp) / num_tokens[i]
    w_v2l_ref  : (B*T, B)   VMEM  one-hot caption groups * (-1/temp) / Q
    g_den_ref  : (B*T, B)   VMEM  plain one-hot caption groups (softmax denom)
    invt_ref   : (1, 1)     SMEM  1 / temperature
    out_*_ref  : (1, 1, B)  VMEM  row j of the (B_j, 1, B_i) cost tensors
    """
    B = batch_size
    inv_t = invt_ref[0, 0]

    pred_j = pred_ref[0]                                              # (Q, D)

    # One lane-dense MXU matmul per grid step, f32 accumulate, then the
    # temperature scaling in f32 (matches reference numerics).
    sim = jnp.dot(pred_j, embs_t_ref[...],
                  preferred_element_type=jnp.float32) * inv_t         # (Q, B*T)

    # ---- language -> vision: softmax over the query axis (sublane reduce);
    # mask / (-1/temp) / 1/num_tokens[i] and the per-caption token-group sum
    # are all folded into one (B*T, B) matmul.
    att_l2v = jax.nn.softmax(sim, axis=0)                             # (Q, B*T)
    cost_l2v = jnp.sum(
        jnp.dot(att_l2v * sim, w_l2v_ref[...],
                preferred_element_type=jnp.float32),
        axis=0, keepdims=True)                                        # (1, B)

    # ---- vision -> language: softmax over each caption's T tokens.
    # Global per-row max shift keeps exp() stable (softmax is shift invariant,
    # so values match the reference); per-caption numerator / denominator
    # sums are lane-dense group matmuls.
    m = jnp.max(sim, axis=1, keepdims=True)                           # (Q, 1)
    e = jnp.exp(sim - m)                                              # (Q, B*T)
    num = jnp.dot(e * sim, w_v2l_ref[...],
                  preferred_element_type=jnp.float32)                 # (Q, B)
    den = jnp.dot(e, g_den_ref[...],
                  preferred_element_type=jnp.float32)                 # (Q, B)
    cost_v2l = jnp.sum(num / den, axis=0, keepdims=True)              # (1, B)

    out_l2v_ref[...] = cost_l2v.reshape(1, 1, B)
    out_v2l_ref[...] = cost_v2l.reshape(1, 1, B)


def grounding_loss(cls_emb_pred, gt_caption_noun_embs, gt_caption_noun_mask,
                   temperature, loss_weight=1.0):
    B, Q, D = cls_emb_pred.shape
    _, T = gt_caption_noun_mask.shape
    BT = B * T

    # Scalar bookkeeping in plain JAX (no in-kernel cross-lane reductions).
    mask_f = gt_caption_noun_mask.astype(jnp.float32)
    num_tokens = mask_f.sum(axis=1)                                   # (B,)
    usable = jnp.all(num_tokens > 0)
    inv_ntok = 1.0 / jnp.maximum(num_tokens, 1.0)                     # safe divide
    inv_t = 1.0 / jnp.asarray(temperature, jnp.float32)

    # Wrapper-side layout plumbing (one-time XLA ops): lane-dense (D, B*T)
    # embeddings and (B*T, B) one-hot caption-group matrices with all the
    # constant factors folded in.
    embs_t = jnp.transpose(gt_caption_noun_embs, (2, 0, 1)).reshape(D, BT)
    group = ((jnp.arange(BT) // T)[:, None] ==
             jnp.arange(B)[None, :]).astype(jnp.float32)              # (BT, B)
    mask_flat = mask_f.reshape(BT, 1)
    w_l2v = group * mask_flat * inv_ntok[None, :] * (-inv_t)
    w_v2l = group * (-inv_t / jnp.float32(Q))
    inv_t_smem = inv_t.reshape(1, 1)

    kernel = functools.partial(_pair_cost_kernel, batch_size=B)

    out_l2v, out_v2l = pl.pallas_call(
        kernel,
        grid=(B,),
        in_specs=[
            pl.BlockSpec((1, Q, D), lambda j: (j, 0, 0)),             # pred block j
            pl.BlockSpec((D, BT), lambda j: (0, 0)),                  # embs (resident)
            pl.BlockSpec((BT, B), lambda j: (0, 0)),                  # l2v weights
            pl.BlockSpec((BT, B), lambda j: (0, 0)),                  # v2l weights
            pl.BlockSpec((BT, B), lambda j: (0, 0)),                  # group one-hot
            pl.BlockSpec(memory_space=pltpu.MemorySpace.SMEM),        # 1/temperature
        ],
        out_specs=(
            pl.BlockSpec((1, 1, B), lambda j: (j, 0, 0)),
            pl.BlockSpec((1, 1, B), lambda j: (j, 0, 0)),
        ),
        out_shape=(
            jax.ShapeDtypeStruct((B, 1, B), jnp.float32),
            jax.ShapeDtypeStruct((B, 1, B), jnp.float32),
        ),
        compiler_params=pltpu.CompilerParams(
            dimension_semantics=("parallel",),
            vmem_limit_bytes=32 * 1024 * 1024),
    )(cls_emb_pred, embs_t, w_l2v, w_v2l, group, inv_t_smem)

    # Tiny (B, B) epilogue in plain JAX: diagonal of -log_softmax over
    # captions / predictions, averaged, gated by the reference "all images
    # have nouns" early-return (folded into a select).
    pw_l2v = out_l2v[:, 0, :].T                  # [caption i, prediction j]
    pw_v2l = out_v2l[:, 0, :].T

    def _term(pw, axis):
        return jnp.mean(-jnp.diagonal(jax.nn.log_softmax(-pw, axis=axis)))

    loss = (_term(pw_l2v, 0) + _term(pw_l2v, 1) +
            _term(pw_v2l, 0) + _term(pw_v2l, 1)) / 4.0
    # TODO(synk): the torch data-dependent early return is expressed as a select.
    return jnp.float32(loss_weight) * jnp.where(usable, loss, jnp.float32(0.0))


def grounding_loss_ref(pred, embs, mask, temperature, loss_weight=1.0):
    """Pure-JAX transliteration of the PyTorch module (for verification)."""
    pred = pred.astype(jnp.float32)
    embs = embs.astype(jnp.float32)
    mask = mask.astype(jnp.float32)
    B, Q, _ = pred.shape
    num_tokens = mask.sum(axis=1)
    if int((num_tokens > 0).sum()) < B:
        return jnp.float32(0.0)
    sim = jnp.einsum('itd,jqd->ijtq', embs, pred) / temperature
    ld = -sim / temperature
    att_l2v = jax.nn.softmax(sim, axis=3) * mask[:, None, :, None]
    pw_l2v = (att_l2v * ld).sum(axis=(2, 3)) / num_tokens[:, None]
    att_v2l = jax.nn.softmax(sim, axis=2)
    pw_v2l = (att_v2l * ld).sum(axis=(2, 3)) / Q

    def term(pw, axis):
        return jnp.mean(-jnp.diag(jax.nn.log_softmax(-pw, axis=axis)))

    loss = (term(pw_l2v, 0) + term(pw_l2v, 1) +
            term(pw_v2l, 0) + term(pw_v2l, 1)) / 4.0
    return loss_weight * loss


if __name__ == "__main__":
    key = jax.random.PRNGKey(0)
    B, Q, T, D = 2, 8, 8, 32                  # batch, queries, max tokens, lang dim
    k1, k2 = jax.random.split(key)
    cls_emb_pred = jax.random.normal(k1, (B, Q, D), jnp.float32)
    gt_caption_noun_embs = jax.random.normal(k2, (B, T, D), jnp.float32)
    gt_caption_noun_mask = jnp.array(
        [[1, 1, 1, 1, 1, 0, 0, 0],
         [1, 1, 1, 0, 0, 0, 0, 0]], jnp.float32)
    temperature = 0.5
    loss_weight = 1.0

    loss = grounding_loss(cls_emb_pred, gt_caption_noun_embs,
                          gt_caption_noun_mask, temperature, loss_weight)
    loss = jax.block_until_ready(loss)

    ref = grounding_loss_ref(cls_emb_pred, gt_caption_noun_embs,
                             gt_caption_noun_mask, temperature, loss_weight)
    np.testing.assert_allclose(np.asarray(loss), np.asarray(ref),
                               rtol=1e-4, atol=1e-4)
    print("KERNEL_OK")
</pallas_src>

<mosaic_0001>
module attributes {stable_mosaic.version = 11 : i64} {
  func.func @_pair_cost_kernel(%arg0: i32, %arg1: memref<1x8x32xf32, #tpu.memory_space<vmem>>, %arg2: memref<32x16xf32, #tpu.memory_space<vmem>>, %arg3: memref<16x2xf32, #tpu.memory_space<vmem>>, %arg4: memref<16x2xf32, #tpu.memory_space<vmem>>, %arg5: memref<16x2xf32, #tpu.memory_space<vmem>>, %arg6: memref<1x1xf32, #tpu.memory_space<smem>>, %arg7: memref<1x1x2xf32, #tpu.memory_space<vmem>>, %arg8: memref<1x1x2xf32, #tpu.memory_space<vmem>>) attributes {dimension_semantics = [#tpu.dimension_semantics<parallel>], iteration_bounds = array<i64: 2>, scalar_prefetch = 0 : i64, scratch_operands = 0 : i64, tpu.core_type = #tpu.core_type<tc>, window_params = [{transform_indices = @transform_0, window_bounds = array<i64: 1, 8, 32>}, {pipeline_mode = #tpu.pipeline_mode<synchronous>, transform_indices = @transform_1, window_bounds = array<i64: 32, 16>}, {pipeline_mode = #tpu.pipeline_mode<synchronous>, transform_indices = @transform_2, window_bounds = array<i64: 16, 2>}, {pipeline_mode = #tpu.pipeline_mode<synchronous>, transform_indices = @transform_3, window_bounds = array<i64: 16, 2>}, {pipeline_mode = #tpu.pipeline_mode<synchronous>, transform_indices = @transform_4, window_bounds = array<i64: 16, 2>}, {transform_indices = @transform_5, window_bounds = array<i64: 1, 1>}, {transform_indices = @transform_6, window_bounds = array<i64: 1, 1, 2>}, {transform_indices = @transform_7, window_bounds = array<i64: 1, 1, 2>}]} {
    %c0 = arith.constant 0 : index
    %c0_0 = arith.constant 0 : index
    %0 = memref.load %arg6[%c0, %c0_0] : memref<1x1xf32, #tpu.memory_space<smem>>
    %c0_1 = arith.constant 0 : index
    %c0_2 = arith.constant 0 : index
    %c0_3 = arith.constant 0 : index
    %1 = vector.load %arg1[%c0_1, %c0_2, %c0_3] : memref<1x8x32xf32, #tpu.memory_space<vmem>>, vector<1x8x32xf32>
    %2 = vector.shape_cast %1 : vector<1x8x32xf32> to vector<8x32xf32>
    %c0_4 = arith.constant 0 : index
    %c0_5 = arith.constant 0 : index
    %3 = vector.load %arg2[%c0_4, %c0_5] : memref<32x16xf32, #tpu.memory_space<vmem>>, vector<32x16xf32>
    %cst = arith.constant dense<0.000000e+00> : vector<8x16xf32>
    %4 = tpu.matmul %2, %3, %cst {dimension_numbers = #tpu.dot_dimension_numbers<[1], [0], [0], [1], [0, 0, 1, 1], [], []>} : vector<8x32xf32>, vector<32x16xf32>, vector<8x16xf32> -> vector<8x16xf32>
    %5 = vector.broadcast %0 : f32 to vector<8x16xf32>
    %6 = arith.mulf %4, %5 : vector<8x16xf32>
    %cst_6 = arith.constant dense<0xFF800000> : vector<16xf32>
    %7 = vector.multi_reduction <maximumf>, %6, %cst_6 [0] : vector<8x16xf32> to vector<16xf32>
    %cst_7 = arith.constant 0xFF800000 : f32
    %8 = vector.broadcast %cst_7 : f32 to vector<16xf32>
    %9 = arith.maximumf %8, %7 : vector<16xf32>
    %10 = vector.shape_cast %9 : vector<16xf32> to vector<1x16xf32>
    %11 = vector.broadcast %10 : vector<1x16xf32> to vector<8x16xf32>
    %12 = arith.subf %6, %11 : vector<8x16xf32>
    %13 = math.exp %12 : vector<8x16xf32>
    %cst_8 = arith.constant dense<0.000000e+00> : vector<16xf32>
    %14 = vector.multi_reduction <add>, %13, %cst_8 [0] : vector<8x16xf32> to vector<16xf32>
    %15 = vector.shape_cast %14 : vector<16xf32> to vector<1x16xf32>
    %16 = vector.broadcast %15 : vector<1x16xf32> to vector<8x16xf32>
    %17 = arith.divf %13, %16 : vector<8x16xf32>
    %18 = arith.mulf %17, %6 : vector<8x16xf32>
    %c0_9 = arith.constant 0 : index
    %c0_10 = arith.constant 0 : index
    %19 = vector.load %arg3[%c0_9, %c0_10] : memref<16x2xf32, #tpu.memory_space<vmem>>, vector<16x2xf32>
    %cst_11 = arith.constant dense<0.000000e+00> : vector<8x2xf32>
    %20 = tpu.matmul %18, %19, %cst_11 {dimension_numbers = #tpu.dot_dimension_numbers<[1], [0], [0], [1], [0, 0, 1, 1], [], []>} : vector<8x16xf32>, vector<16x2xf32>, vector<8x2xf32> -> vector<8x2xf32>
    %cst_12 = arith.constant dense<0.000000e+00> : vector<2xf32>
    %21 = vector.multi_reduction <add>, %20, %cst_12 [0] : vector<8x2xf32> to vector<2xf32>
    %22 = vector.shape_cast %21 : vector<2xf32> to vector<1x2xf32>
    %cst_13 = arith.constant dense<0xFF800000> : vector<8xf32>
    %23 = vector.multi_reduction <maximumf>, %6, %cst_13 [1] : vector<8x16xf32> to vector<8xf32>
    %24 = vector.shape_cast %23 : vector<8xf32> to vector<8x1xf32>
    %25 = vector.broadcast %24 : vector<8x1xf32> to vector<8x16xf32>
    %26 = arith.subf %6, %25 : vector<8x16xf32>
    %27 = math.exp %26 : vector<8x16xf32>
    %28 = arith.mulf %27, %6 : vector<8x16xf32>
    %c0_14 = arith.constant 0 : index
    %c0_15 = arith.constant 0 : index
    %29 = vector.load %arg4[%c0_14, %c0_15] : memref<16x2xf32, #tpu.memory_space<vmem>>, vector<16x2xf32>
    %cst_16 = arith.constant dense<0.000000e+00> : vector<8x2xf32>
    %30 = tpu.matmul %28, %29, %cst_16 {dimension_numbers = #tpu.dot_dimension_numbers<[1], [0], [0], [1], [0, 0, 1, 1], [], []>} : vector<8x16xf32>, vector<16x2xf32>, vector<8x2xf32> -> vector<8x2xf32>
    %c0_17 = arith.constant 0 : index
    %c0_18 = arith.constant 0 : index
    %31 = vector.load %arg5[%c0_17, %c0_18] : memref<16x2xf32, #tpu.memory_space<vmem>>, vector<16x2xf32>
    %cst_19 = arith.constant dense<0.000000e+00> : vector<8x2xf32>
    %32 = tpu.matmul %27, %31, %cst_19 {dimension_numbers = #tpu.dot_dimension_numbers<[1], [0], [0], [1], [0, 0, 1, 1], [], []>} : vector<8x16xf32>, vector<16x2xf32>, vector<8x2xf32> -> vector<8x2xf32>
    %33 = arith.divf %30, %32 : vector<8x2xf32>
    %cst_20 = arith.constant dense<0.000000e+00> : vector<2xf32>
    %34 = vector.multi_reduction <add>, %33, %cst_20 [0] : vector<8x2xf32> to vector<2xf32>
    %35 = vector.shape_cast %34 : vector<2xf32> to vector<1x2xf32>
    %36 = vector.shape_cast %22 : vector<1x2xf32> to vector<1x1x2xf32>
    %c0_21 = arith.constant 0 : index
    %c0_22 = arith.constant 0 : index
    %c0_23 = arith.constant 0 : index
    %37 = vector.load %arg7[%c0_21, %c0_22, %c0_23] : memref<1x1x2xf32, #tpu.memory_space<vmem>>, vector<1x1x2xf32>
    tpu.vector_store %arg7[%c0_21, %c0_22, %c0_23], %36 {strides = array<i32>} : memref<1x1x2xf32, #tpu.memory_space<vmem>>, vector<1x1x2xf32>,
    %38 = vector.shape_cast %35 : vector<1x2xf32> to vector<1x1x2xf32>
    %c0_24 = arith.constant 0 : index
    %c0_25 = arith.constant 0 : index
    %c0_26 = arith.constant 0 : index
    %39 = vector.load %arg8[%c0_24, %c0_25, %c0_26] : memref<1x1x2xf32, #tpu.memory_space<vmem>>, vector<1x1x2xf32>
    tpu.vector_store %arg8[%c0_24, %c0_25, %c0_26], %38 {strides = array<i32>} : memref<1x1x2xf32, #tpu.memory_space<vmem>>, vector<1x1x2xf32>,
    return
  }
  func.func @transform_0(%arg0: i32) -> (i32, i32, i32) {
    %c0_i32 = arith.constant 0 : i32
    %c0_i32_0 = arith.constant 0 : i32
    %c0_i32_1 = arith.constant 0 : i32
    return %arg0, %c0_i32, %c0_i32_0 : i32, i32, i32
  }
  func.func @transform_1(%arg0: i32) -> (i32, i32) {
    %c0_i32 = arith.constant 0 : i32
    %c0_i32_0 = arith.constant 0 : i32
    %c0_i32_1 = arith.constant 0 : i32
    return %c0_i32, %c0_i32_0 : i32, i32
  }
  func.func @transform_2(%arg0: i32) -> (i32, i32) {
    %c0_i32 = arith.constant 0 : i32
    %c0_i32_0 = arith.constant 0 : i32
    %c0_i32_1 = arith.constant 0 : i32
    return %c0_i32, %c0_i32_0 : i32, i32
  }
  func.func @transform_3(%arg0: i32) -> (i32, i32) {
    %c0_i32 = arith.constant 0 : i32
    %c0_i32_0 = arith.constant 0 : i32
    %c0_i32_1 = arith.constant 0 : i32
    return %c0_i32, %c0_i32_0 : i32, i32
  }
  func.func @transform_4(%arg0: i32) -> (i32, i32) {
    %c0_i32 = arith.constant 0 : i32
    %c0_i32_0 = arith.constant 0 : i32
    %c0_i32_1 = arith.constant 0 : i32
    return %c0_i32, %c0_i32_0 : i32, i32
  }
  func.func @transform_5(%arg0: i32) -> (i32, i32) {
    %c0_i32 = arith.constant 0 : i32
    %c0_i32_0 = arith.constant 0 : i32
    %c0_i32_1 = arith.constant 0 : i32
    return %c0_i32, %c0_i32_0 : i32, i32
  }
  func.func @transform_6(%arg0: i32) -> (i32, i32, i32) {
    %c0_i32 = arith.constant 0 : i32
    %c0_i32_0 = arith.constant 0 : i32
    %c0_i32_1 = arith.constant 0 : i32
    return %arg0, %c0_i32, %c0_i32_0 : i32, i32, i32
  }
  func.func @transform_7(%arg0: i32) -> (i32, i32, i32) {
    %c0_i32 = arith.constant 0 : i32
    %c0_i32_0 = arith.constant 0 : i32
    %c0_i32_1 = arith.constant 0 : i32
    return %arg0, %c0_i32, %c0_i32_0 : i32, i32, i32
  }
}

</mosaic_0001>

<llo_original>
// kernel: tpu_custom_call.1
$region0: #{tpu_custom_call.1}
  #allocation0 [shape = 'u32[]', space=smem, size = 0x4, offset = 0x4, fixed_abs, tag = 'smem constant byte address 0x4 - core index']
  #allocation1 [shape = 'u32[144,128]{1,0:T(1,128)}', space=vmem, size = 0x12000, scoped, tag = 'internal scratch']
  #allocation2 [shape = 'f32[1,1]{1,0:T(1,128)S(6)}', space=smem, size = 0x200, scoped, tag = 'scoped memory for tpu_custom_call.1']
  %s0 = inlined_call_operand.vmem [shape: f32[2,8,32], index: 0, kind: input, shape index: {}]
  %s1 = inlined_call_operand.vmem [shape: f32[32,16], index: 1, kind: input, shape index: {}]
  %s2 = inlined_call_operand.vmem [shape: f32[16,2], index: 2, kind: input, shape index: {}]
  %s3 = inlined_call_operand.vmem [shape: f32[16,2], index: 3, kind: input, shape index: {}]
  %s4 = inlined_call_operand.vmem [shape: f32[16,2], index: 4, kind: input, shape index: {}]
  %s5 = inlined_call_operand.<no memory space> [shape: f32[1,1], index: 5, kind: input, shape index: {}]
  %s6 = inlined_call_operand.hbm [shape: f32[2,1,2], index: 6, kind: output, shape index: {0}]
  %s7 = inlined_call_operand.hbm [shape: f32[2,1,2], index: 7, kind: output, shape index: {1}]
  %8 = xla_tuple %s6, %s7
  %s9 = sld [smem:[#allocation0]]
  $region65: #{tpu_custom_call.1} parent=0
    _
  %s11 = ssub.s32 1, %s9
  %s12 = scalar_select 0, %s11, %s9
  %13 = sst [smem:[#allocation2]] %s5
  $region1: #{tpu_custom_call.1} parent=0
    #allocation3 [shape = 'u8[1024]{0}', space=vmem, size = 0x400, scoped, tag = 'output window, operand 0']
    #allocation4 [shape = 's32[2]{0}', space=sflag, size = 0x8, scoped, tag = 'scoped memory for tpu_custom_call.1']
    #allocation5 [shape = 'u8[1024]{0}', space=vmem, size = 0x400, scoped, tag = 'output window, operand 1']
    #allocation6 [shape = 's32[2]{0}', space=sflag, size = 0x8, scoped, tag = 'scoped memory for tpu_custom_call.1']
    %14 = vsyncpa [#allocation4], 0
    %s15 = scalar_lea.sflag [#allocation4], 1
    %16 = vsyncpa %s15, 0
    %17 = vsyncpa [#allocation6], 0
    %s18 = scalar_lea.sflag [#allocation6], 1
    %19 = vsyncpa %s18, 0
    loop: start=0, step=1, limit=4
    $region2: #{tpu_custom_call.1} parent=1 // loop_pre_header
      _
    $region3: #{tpu_custom_call.1} parent=1 // loop_header
      %s21 = sphi 0, %s25
      %p22 = scmp.ge.s32.totalorder %s21, 4
      %s31 = sphi 0, %s33
      %s34 = sphi 0, %s31
      %s35 = sphi 0, %s34
      %s51 = sphi 0, %s35
      %s55 = sphi 0, %s55
      %s57 = sphi 0, %s55
      %s58 = sphi 0, %s57
      %s72 = sphi 0, %s58
      %s76 = sphi 0, %s76
      %s78 = sphi 0, %s76
      %s79 = sphi 0, %s78
      %s93 = sphi 0, %s79
      %s97 = sphi 0, %s97
      %s99 = sphi 0, %s97
      %s100 = sphi 0, %s99
      %s114 = sphi 0, %s100
      %s118 = sphi 0, %s118
      %s120 = sphi 0, %s118
      %s121 = sphi 0, %s120
      %s135 = sphi 0, %s121
      %s139 = sphi 0, %s139
      %s141 = sphi 0, %s139
      %s142 = sphi 0, %s141
      %s156 = sphi 0, %s142
      %s162 = sphi 0, %s164
      %s165 = sphi 0, %s162
      %s166 = sphi 0, %s165
      %s182 = sphi 0, %s166
      %s188 = sphi 0, %s190
      %s191 = sphi 0, %s188
      %s192 = sphi 0, %s191
      %s208 = sphi 0, %s192
    $region4: #{tpu_custom_call.1} parent=1 // loop_header_branch
      %24 = sbr.rel (%p22) target = $region8
    $region5: #{tpu_custom_call.1} parent=1 // loop_body
      %s26 = ssub.s32 %s21, 1
      %s27 = ssub.s32 %s21, 2
      %s28 = sadd.s32 %s21, 1
      %s29 = ssub.s32 %s21, %s28
      %p30 = scmp.eq.s32.totalorder %s29, 0
      %s32 = sadd.s32 %s31, 1
      %s33 = scalar_select %p30, %s31, %s32
      %p36 = pneg %p30
      %p37 = scmp.eq.s32.totalorder %s21, 1
      %p38 = por %p36, %p37
      %p39 = scmp.ne.s32.totalorder %s31, %s34
      %p40 = scmp.eq.s32.totalorder %s21, 0
      %p41 = por %p39, %p40
      %p42 = scmp.ne.s32.totalorder %s31, %s34
      %p43 = scmp.eq.s32.totalorder %s26, 1
      %p44 = por %p42, %p43
      %p45 = scmp.ne.s32.totalorder %s34, %s35
      %p46 = scmp.eq.s32.totalorder %s26, 0
      %p47 = por %p45, %p46
      %p48 = scmp.ne.s32.totalorder %s34, %s35
      %p49 = scmp.eq.s32.totalorder %s27, 1
      %p50 = por %p48, %p49
      %p52 = scmp.ne.s32.totalorder %s35, %s51
      %p53 = scmp.eq.s32.totalorder %s27, 0
      %p54 = por %p52, %p53
      %s56 = sadd.s32 %s55, 1
      %p59 = scmp.eq.s32.totalorder %s21, 1
      %p60 = scmp.ne.s32.totalorder %s55, %s57
      %p61 = scmp.eq.s32.totalorder %s21, 0
      %p62 = por %p60, %p61
      %p63 = scmp.ne.s32.totalorder %s55, %s57
      %p64 = scmp.eq.s32.totalorder %s26, 1
      %p65 = por %p63, %p64
      %p66 = scmp.ne.s32.totalorder %s57, %s58
      %p67 = scmp.eq.s32.totalorder %s26, 0
      %p68 = por %p66, %p67
      %p69 = scmp.ne.s32.totalorder %s57, %s58
      %p70 = scmp.eq.s32.totalorder %s27, 1
      %p71 = por %p69, %p70
      %p73 = scmp.ne.s32.totalorder %s58, %s72
      %p74 = scmp.eq.s32.totalorder %s27, 0
      %p75 = por %p73, %p74
      %s77 = sadd.s32 %s76, 1
      %p80 = scmp.eq.s32.totalorder %s21, 1
      %p81 = scmp.ne.s32.totalorder %s76, %s78
      %p82 = scmp.eq.s32.totalorder %s21, 0
      %p83 = por %p81, %p82
      %p84 = scmp.ne.s32.totalorder %s76, %s78
      %p85 = scmp.eq.s32.totalorder %s26, 1
      %p86 = por %p84, %p85
      %p87 = scmp.ne.s32.totalorder %s78, %s79
      %p88 = scmp.eq.s32.totalorder %s26, 0
      %p89 = por %p87, %p88
      %p90 = scmp.ne.s32.totalorder %s78, %s79
      %p91 = scmp.eq.s32.totalorder %s27, 1
      %p92 = por %p90, %p91
      %p94 = scmp.ne.s32.totalorder %s79, %s93
      %p95 = scmp.eq.s32.totalorder %s27, 0
      %p96 = por %p94, %p95
      %s98 = sadd.s32 %s97, 1
      %p101 = scmp.eq.s32.totalorder %s21, 1
      %p102 = scmp.ne.s32.totalorder %s97, %s99
      %p103 = scmp.eq.s32.totalorder %s21, 0
      %p104 = por %p102, %p103
      %p105 = scmp.ne.s32.totalorder %s97, %s99
      %p106 = scmp.eq.s32.totalorder %s26, 1
      %p107 = por %p105, %p106
      %p108 = scmp.ne.s32.totalorder %s99, %s100
      %p109 = scmp.eq.s32.totalorder %s26, 0
      %p110 = por %p108, %p109
      %p111 = scmp.ne.s32.totalorder %s99, %s100
      %p112 = scmp.eq.s32.totalorder %s27, 1
      %p113 = por %p111, %p112
      %p115 = scmp.ne.s32.totalorder %s100, %s114
      %p116 = scmp.eq.s32.totalorder %s27, 0
      %p117 = por %p115, %p116
      %s119 = sadd.s32 %s118, 1
      %p122 = scmp.eq.s32.totalorder %s21, 1
      %p123 = scmp.ne.s32.totalorder %s118, %s120
      %p124 = scmp.eq.s32.totalorder %s21, 0
      %p125 = por %p123, %p124
      %p126 = scmp.ne.s32.totalorder %s118, %s120
      %p127 = scmp.eq.s32.totalorder %s26, 1
      %p128 = por %p126, %p127
      %p129 = scmp.ne.s32.totalorder %s120, %s121
      %p130 = scmp.eq.s32.totalorder %s26, 0
      %p131 = por %p129, %p130
      %p132 = scmp.ne.s32.totalorder %s120, %s121
      %p133 = scmp.eq.s32.totalorder %s27, 1
      %p134 = por %p132, %p133
      %p136 = scmp.ne.s32.totalorder %s121, %s135
      %p137 = scmp.eq.s32.totalorder %s27, 0
      %p138 = por %p136, %p137
      %s140 = sadd.s32 %s139, 1
      %p143 = scmp.eq.s32.totalorder %s21, 1
      %p144 = scmp.ne.s32.totalorder %s139, %s141
      %p145 = scmp.eq.s32.totalorder %s21, 0
      %p146 = por %p144, %p145
      %p147 = scmp.ne.s32.totalorder %s139, %s141
      %p148 = scmp.eq.s32.totalorder %s26, 1
      %p149 = por %p147, %p148
      %p150 = scmp.ne.s32.totalorder %s141, %s142
      %p151 = scmp.eq.s32.totalorder %s26, 0
      %p152 = por %p150, %p151
      %p153 = scmp.ne.s32.totalorder %s141, %s142
      %p154 = scmp.eq.s32.totalorder %s27, 1
      %p155 = por %p153, %p154
      %p157 = scmp.ne.s32.totalorder %s142, %s156
      %p158 = scmp.eq.s32.totalorder %s27, 0
      %p159 = por %p157, %p158
      %s160 = ssub.s32 %s21, %s28
      %p161 = scmp.eq.s32.totalorder %s160, 0
      %s163 = sadd.s32 %s162, 1
      %s164 = scalar_select %p161, %s162, %s163
      %p167 = pneg %p161
      %p168 = scmp.eq.s32.totalorder %s21, 1
      %p169 = por %p167, %p168
      %p170 = scmp.ne.s32.totalorder %s162, %s165
      %p171 = scmp.eq.s32.totalorder %s21, 0
      %p172 = por %p170, %p171
      %p173 = scmp.ne.s32.totalorder %s162, %s165
      %p174 = scmp.eq.s32.totalorder %s26, 1
      %p175 = por %p173, %p174
      %p176 = scmp.ne.s32.totalorder %s165, %s166
      %p177 = scmp.eq.s32.totalorder %s26, 0
      %p178 = por %p176, %p177
      %p179 = scmp.ne.s32.totalorder %s165, %s166
      %p180 = scmp.eq.s32.totalorder %s27, 1
      %p181 = por %p179, %p180
      %p183 = scmp.ne.s32.totalorder %s166, %s182
      %p184 = scmp.eq.s32.totalorder %s27, 0
      %p185 = por %p183, %p184
      %s186 = ssub.s32 %s21, %s28
      %p187 = scmp.eq.s32.totalorder %s186, 0
      %s189 = sadd.s32 %s188, 1
      %s190 = scalar_select %p187, %s188, %s189
      %p193 = pneg %p187
      %p194 = scmp.eq.s32.totalorder %s21, 1
      %p195 = por %p193, %p194
      %p196 = scmp.ne.s32.totalorder %s188, %s191
      %p197 = scmp.eq.s32.totalorder %s21, 0
      %p198 = por %p196, %p197
      %p199 = scmp.ne.s32.totalorder %s188, %s191
      %p200 = scmp.eq.s32.totalorder %s26, 1
      %p201 = por %p199, %p200
      %p202 = scmp.ne.s32.totalorder %s191, %s192
      %p203 = scmp.eq.s32.totalorder %s26, 0
      %p204 = por %p202, %p203
      %p205 = scmp.ne.s32.totalorder %s191, %s192
      %p206 = scmp.eq.s32.totalorder %s27, 1
      %p207 = por %p205, %p206
      %p209 = scmp.ne.s32.totalorder %s192, %s208
      %p210 = scmp.eq.s32.totalorder %s27, 0
      %p211 = por %p209, %p210
      %p212 = scmp.le.s32.totalorder 1, %s21
      %p213 = scmp.lt.s32.totalorder %s21, 3
      %p214 = pnand %p212, %p213
      %p215 = pneg %p214
      // Predicated region
      $region9: #{tpu_custom_call.1} parent=5 // pred_check
        _
      $region10: #{tpu_custom_call.1} parent=5 // pred_check_branch
        %217 = sbr.rel (%p214) target = $region12
      $region11: #{tpu_custom_call.1} parent=5 // pred_region
        %s218 = ssub.s32 %s21, 1
        // Predicated region
        $region13: #{tpu_custom_call.1} parent=11 // pred_check
          %p219 = pneg %p68
        $region14: #{tpu_custom_call.1} parent=11 // pred_check_branch
          %221 = sbr.rel (%p219) target = $region16
        $region15: #{tpu_custom_call.1} parent=11 // pred_region
          _
        $region16: #{tpu_custom_call.1} parent=11 // pred_fallthru
          _
        // Predicated region
        $region17: #{tpu_custom_call.1} parent=11 // pred_check
          %p222 = pneg %p89
        $region18: #{tpu_custom_call.1} parent=11 // pred_check_branch
          %224 = sbr.rel (%p222) target = $region20
        $region19: #{tpu_custom_call.1} parent=11 // pred_region
          _
        $region20: #{tpu_custom_call.1} parent=11 // pred_fallthru
          _
        // Predicated region
        $region21: #{tpu_custom_call.1} parent=11 // pred_check
          %p225 = pneg %p110
        $region22: #{tpu_custom_call.1} parent=11 // pred_check_branch
          %227 = sbr.rel (%p225) target = $region24
        $region23: #{tpu_custom_call.1} parent=11 // pred_region
          _
        $region24: #{tpu_custom_call.1} parent=11 // pred_fallthru
          _
        // Predicated region
        $region25: #{tpu_custom_call.1} parent=11 // pred_check
          %p228 = pneg %p131
        $region26: #{tpu_custom_call.1} parent=11 // pred_check_branch
          %230 = sbr.rel (%p228) target = $region28
        $region27: #{tpu_custom_call.1} parent=11 // pred_region
          _
        $region28: #{tpu_custom_call.1} parent=11 // pred_fallthru
          _
        // Predicated region
        $region29: #{tpu_custom_call.1} parent=11 // pred_check
          %p231 = pneg %p152
        $region30: #{tpu_custom_call.1} parent=11 // pred_check_branch
          %233 = sbr.rel (%p231) target = $region32
        $region31: #{tpu_custom_call.1} parent=11 // pred_region
          _
        $region32: #{tpu_custom_call.1} parent=11 // pred_fallthru
          _
      $region12: #{tpu_custom_call.1} parent=5 // pred_fallthru
        _
      %p234 = scmp.lt.s32.totalorder %s21, 2
      // Predicated region
      $region33: #{tpu_custom_call.1} parent=5 // pred_check
        %p235 = pneg %p234
      $region34: #{tpu_custom_call.1} parent=5 // pred_check_branch
        %237 = sbr.rel (%p235) target = $region36
      $region35: #{tpu_custom_call.1} parent=5 // pred_region
        // Predicated region
        $region37: #{tpu_custom_call.1} parent=35 // pred_check
          %p238 = pneg %p41
        $region38: #{tpu_custom_call.1} parent=35 // pred_check_branch
          %240 = sbr.rel (%p238) target = $region40
        $region39: #{tpu_custom_call.1} parent=35 // pred_region
          %p241 = scmp.lt.s32.totalorder %s21, 1
          %s242 = scalar_select %p241, %s21, 1
          %s243 = smul.addr %s242, 8
          %s244 = scalar_lea.vmem %s0, %s243
        $region40: #{tpu_custom_call.1} parent=35 // pred_fallthru
          _
      $region36: #{tpu_custom_call.1} parent=5 // pred_fallthru
        _
      %p245 = scmp.le.s32.totalorder 1, %s21
      %p246 = scmp.lt.s32.totalorder %s21, 3
      %p247 = pnand %p245, %p246
      %p248 = pneg %p247
      // Predicated region
      $region41: #{tpu_custom_call.1} parent=5 // pred_check
        _
      $region42: #{tpu_custom_call.1} parent=5 // pred_check_branch
        %250 = sbr.rel (%p247) target = $region44
      $region43: #{tpu_custom_call.1} parent=5 // pred_region
        %s251 = ssub.s32 %s21, 1
        %p252 = scmp.lt.s32.totalorder %s26, 1
        %s253 = scalar_select %p252, %s26, 1
        %s254 = smul.addr %s253, 8
        %s255 = scalar_lea.vmem %s0, %s254
        %p256 = pneg %p47
        %p257 = pneg %p44
        %p258 = pneg %p68
        %p259 = pneg %p65
        %p260 = pneg %p89
        %p261 = pneg %p86
        %p262 = pneg %p110
        %p263 = pneg %p107
        %p264 = pneg %p131
        %p265 = pneg %p128
        %p266 = pneg %p152
        %p267 = pneg %p149
        %p268 = pneg %p178
        %p269 = pneg %p175
        %s270 = sand.u32 %s165, 1
        %s271 = scalar_lea.sflag [#allocation4], %s270
        %s272 = sand.u32 %s165, 1
        %s273 = scalar_lea.vmem [#allocation3], %s272
        %p274 = pneg %p204
        %p275 = pneg %p201
        %s276 = sand.u32 %s191, 1
        %s277 = scalar_lea.sflag [#allocation6], %s276
        %s278 = sand.u32 %s191, 1
        %s279 = scalar_lea.vmem [#allocation5], %s278
        %p280 = scmp.lt.s32.totalorder %s26, 1
        %s281 = scalar_select %p280, %s26, 1
        %s282 = smul.addr %s281, 8
        %s283 = scalar_lea.vmem %s0, %s282
        %s284 = sld [smem:[#allocation2]]
        %v285 = vld [vmem:[%s283] sm:$0xff]
        %v286 = vld [vmem:[%s1] sm:$0xff]
        %v287 = vld [vmem:[%s1 + $0x8] sm:$0xff]
        %v288 = vld [vmem:[%s1 + $0x10] sm:$0xff]
        %v289 = vld [vmem:[%s1 + $0x18] sm:$0xff]
        %vm290 = vcmask 261120
        %v292 = vsel %vm290, %v285, 0
        %294 = vmatprep.subr.mxu0 0.0
        %295 = vmatpush1.msra.mxu0 %v286
        %296 = vmatprep.subr.mxu0 0.0
        %297 = vmatpush1.msra.mxu0 %v287
        %298 = vmatprep.subr.mxu0 0.0
        %299 = vmatpush1.msra.mxu0 %v288
        %300 = vmatprep.subr.mxu0 0.0
        %301 = vmatpush1.msra.mxu0 %v289
        %302 = vmatprep.subr.mxu0 0.0
        %303 = vmatpush1.msra.mxu0 0.0
        %304 = vmatprep.subr.mxu0 0.0
        %305 = vmatpush1.msra.mxu0 0.0
        %306 = vmatprep.subr.mxu0 0.0
        %307 = vmatpush1.msra.mxu0 0.0
        %308 = vmatprep.subr.mxu0 0.0
        %309 = vmatpush1.msra.mxu0 0.0
        %310 = vmatprep.subr.mxu0 0.0
        %311 = vmatpush1.msra.mxu0 0.0
        %312 = vmatprep.subr.mxu0 0.0
        %313 = vmatpush1.msra.mxu0 0.0
        %314 = vmatprep.subr.mxu0 0.0
        %315 = vmatpush1.msra.mxu0 0.0
        %316 = vmatprep.subr.mxu0 0.0
        %317 = vmatpush1.msra.mxu0 0.0
        %318 = vmatprep.subr.mxu0 0.0
        %319 = vmatpush1.msra.mxu0 0.0
        %320 = vmatprep.subr.mxu0 0.0
        %321 = vmatpush1.msra.mxu0 0.0
        %322 = vmatprep.subr.mxu0 0.0
        %323 = vmatpush1.msra.mxu0 0.0
        %324 = vmatprep.subr.mxu0 0.0
        %325 = vmatpush1.msra.mxu0 0.0
        %326 = vmatprep.subr.mxu0 0.0
        %327 = vmatpush1.msra.mxu0 0.0
        %328 = vmatprep.subr.mxu0 0.0
        %329 = vmatpush1.msra.mxu0 0.0
        %330 = vmatprep.subr.mxu0 0.0
        %331 = vmatpush1.msra.mxu0 0.0
        %332 = vmatprep.subr.mxu0 0.0
        %333 = vmatpush1.msra.mxu0 0.0
        %334 = vmatprep.subr.mxu0 0.0
        %335 = vmatpush1.msra.mxu0 0.0
        %336 = vmatprep.subr.mxu0 0.0
        %337 = vmatpush1.msra.mxu0 0.0
        %338 = vmatprep.subr.mxu0 0.0
        %339 = vmatpush1.msra.mxu0 0.0
        %340 = vmatprep.subr.mxu0 0.0
        %341 = vmatpush1.msra.mxu0 0.0
        %342 = vmatprep.subr.mxu0 0.0
        %343 = vmatpush1.msra.mxu0 0.0
        %344 = vmatprep.subr.mxu0 0.0
        %345 = vmatpush1.msra.mxu0 0.0
        %346 = vmatprep.subr.mxu0 0.0
        %347 = vmatpush1.msra.mxu0 0.0
        %348 = vmatprep.subr.mxu0 0.0
        %349 = vmatpush1.msra.mxu0 0.0
        %350 = vmatprep.subr.mxu0 0.0
        %351 = vmatpush1.msra.mxu0 0.0
        %352 = vmatprep.subr.mxu0 0.0
        %353 = vmatpush1.msra.mxu0 0.0
        %354 = vmatprep.subr.mxu0 0.0
        %355 = vmatpush1.msra.mxu0 0.0
        %356 = vmatprep.subr.mxu0 0.0
        %357 = vmatpush1.msra.mxu0 0.0
        %358 = vmatprep.mubr.f32.mxu0 0.0
        %359 = vmatmul.mubr.f32.gmra.mrb[0].mxu0 %v292
        %v360 = vpop.f32.mrb[0].mxu0
        %v361 = vadd.f32 0.0, %v360
        %v362 = vpop.f32.mrb[0].mxu0
        %363 = vdwg.mxu0
        %v364 = vstv %s284
        %v365 = vmul.f32 %v361, %v364
        %vm366 = vcmask 130048
        %v367 = vsel %vm366, %v365, -inf
        %v368 = vrot.slane %v367, 4
        %v369 = vmax.f32 %v367, %v368
        %v370 = vrot.slane %v369, 2
        %v371 = vmax.f32 %v369, %v370
        %v372 = vrot.slane %v371, 1
        %v373 = vmax.f32 %v371, %v372
        %v374 = vsub.f32 %v365, %v373
        %v375 = vmul.f32 %v374, 1.442695
        %v376 = vpow.pop %v375
        %v377 = vsel %vm366, %v376, 0.0
        %v378 = vrot.slane %v377, 4
        %v379 = vadd.f32 %v377, %v378
        %v380 = vrot.slane %v379, 2
        %v381 = vadd.f32 %v379, %v380
        %v382 = vrot.slane %v381, 1
        %v383 = vadd.f32 %v381, %v382
        %v384 = vrcp.pop %v383
        %v385 = vmul.f32 %v376, %v384
        %v386 = vmul.f32 %v385, %v365
        %v387 = vld [vmem:[%s2] sm:$0xff]
        %v388 = vld [vmem:[%s2 + $0x8] sm:$0xff]
        %v390 = vsel %vm366, %v386, 0
        %392 = vmatprep.subr.mxu0 0.0
        %393 = vmatpush1.msra.mxu0 %v387
        %394 = vmatprep.subr.mxu0 0.0
        %395 = vmatpush1.msra.mxu0 %v388
        %396 = vmatprep.subr.mxu0 0.0
        %397 = vmatpush1.msra.mxu0 0.0
        %398 = vmatprep.subr.mxu0 0.0
        %399 = vmatpush1.msra.mxu0 0.0
        %400 = vmatprep.subr.mxu0 0.0
        %401 = vmatpush1.msra.mxu0 0.0
        %402 = vmatprep.subr.mxu0 0.0
        %403 = vmatpush1.msra.mxu0 0.0
        %404 = vmatprep.subr.mxu0 0.0
        %405 = vmatpush1.msra.mxu0 0.0
        %406 = vmatprep.subr.mxu0 0.0
        %407 = vmatpush1.msra.mxu0 0.0
        %408 = vmatprep.subr.mxu0 0.0
        %409 = vmatpush1.msra.mxu0 0.0
        %410 = vmatprep.subr.mxu0 0.0
        %411 = vmatpush1.msra.mxu0 0.0
        %412 = vmatprep.subr.mxu0 0.0
        %413 = vmatpush1.msra.mxu0 0.0
        %414 = vmatprep.subr.mxu0 0.0
        %415 = vmatpush1.msra.mxu0 0.0
        %416 = vmatprep.subr.mxu0 0.0
        %417 = vmatpush1.msra.mxu0 0.0
        %418 = vmatprep.subr.mxu0 0.0
        %419 = vmatpush1.msra.mxu0 0.0
        %420 = vmatprep.subr.mxu0 0.0
        %421 = vmatpush1.msra.mxu0 0.0
        %422 = vmatprep.subr.mxu0 0.0
        %423 = vmatpush1.msra.mxu0 0.0
        %424 = vmatprep.subr.mxu0 0.0
        %425 = vmatpush1.msra.mxu0 0.0
        %426 = vmatprep.subr.mxu0 0.0
        %427 = vmatpush1.msra.mxu0 0.0
        %428 = vmatprep.subr.mxu0 0.0
        %429 = vmatpush1.msra.mxu0 0.0
        %430 = vmatprep.subr.mxu0 0.0
        %431 = vmatpush1.msra.mxu0 0.0
        %432 = vmatprep.subr.mxu0 0.0
        %433 = vmatpush1.msra.mxu0 0.0
        %434 = vmatprep.subr.mxu0 0.0
        %435 = vmatpush1.msra.mxu0 0.0
        %436 = vmatprep.subr.mxu0 0.0
        %437 = vmatpush1.msra.mxu0 0.0
        %438 = vmatprep.subr.mxu0 0.0
        %439 = vmatpush1.msra.mxu0 0.0
        %440 = vmatprep.subr.mxu0 0.0
        %441 = vmatpush1.msra.mxu0 0.0
        %442 = vmatprep.subr.mxu0 0.0
        %443 = vmatpush1.msra.mxu0 0.0
        %444 = vmatprep.subr.mxu0 0.0
        %445 = vmatpush1.msra.mxu0 0.0
        %446 = vmatprep.subr.mxu0 0.0
        %447 = vmatpush1.msra.mxu0 0.0
        %448 = vmatprep.subr.mxu0 0.0
        %449 = vmatpush1.msra.mxu0 0.0
        %450 = vmatprep.subr.mxu0 0.0
        %451 = vmatpush1.msra.mxu0 0.0
        %452 = vmatprep.subr.mxu0 0.0
        %453 = vmatpush1.msra.mxu0 0.0
        %454 = vmatprep.subr.mxu0 0.0
        %455 = vmatpush1.msra.mxu0 0.0
        %456 = vmatprep.mubr.f32.mxu0 0.0
        %457 = vmatmul.mubr.f32.gmra.mrb[0].mxu0 %v390
        %v458 = vpop.f32.mrb[0].mxu0
        %v459 = vadd.f32 0.0, %v458
        %v460 = vpop.f32.mrb[0].mxu0
        %461 = vdwg.mxu0
        %vm462 = vcmask 15360
        %v463 = vsel %vm462, %v459, 0.0
        %v464 = vrot.slane %v463, 4
        %v465 = vadd.f32 %v463, %v464
        %v466 = vrot.slane %v465, 2
        %v467 = vadd.f32 %v465, %v466
        %v468 = vrot.slane %v467, 1
        %v469 = vadd.f32 %v467, %v468
        %470 = vmax.xlane.f32.xlu0 %v367
        %v471 = vpop.xlane.xlu0 %470
        %v472 = vsub.f32 %v365, %v471
        %v473 = vmul.f32 %v472, 1.442695
        %v474 = vpow.pop %v473
        %v475 = vmul.f32 %v474, %v365
        %v476 = vld [vmem:[%s3] sm:$0xff]
        %v477 = vld [vmem:[%s3 + $0x8] sm:$0xff]
        %v479 = vsel %vm366, %v475, 0
        %481 = vmatprep.subr.mxu0 0.0
        %482 = vmatpush1.msra.mxu0 %v476
        %483 = vmatprep.subr.mxu0 0.0
        %484 = vmatpush1.msra.mxu0 %v477
        %485 = vmatprep.subr.mxu0 0.0
        %486 = vmatpush1.msra.mxu0 0.0
        %487 = vmatprep.subr.mxu0 0.0
        %488 = vmatpush1.msra.mxu0 0.0
        %489 = vmatprep.subr.mxu0 0.0
        %490 = vmatpush1.msra.mxu0 0.0
        %491 = vmatprep.subr.mxu0 0.0
        %492 = vmatpush1.msra.mxu0 0.0
        %493 = vmatprep.subr.mxu0 0.0
        %494 = vmatpush1.msra.mxu0 0.0
        %495 = vmatprep.subr.mxu0 0.0
        %496 = vmatpush1.msra.mxu0 0.0
        %497 = vmatprep.subr.mxu0 0.0
        %498 = vmatpush1.msra.mxu0 0.0
        %499 = vmatprep.subr.mxu0 0.0
        %500 = vmatpush1.msra.mxu0 0.0
        %501 = vmatprep.subr.mxu0 0.0
        %502 = vmatpush1.msra.mxu0 0.0
        %503 = vmatprep.subr.mxu0 0.0
        %504 = vmatpush1.msra.mxu0 0.0
        %505 = vmatprep.subr.mxu0 0.0
        %506 = vmatpush1.msra.mxu0 0.0
        %507 = vmatprep.subr.mxu0 0.0
        %508 = vmatpush1.msra.mxu0 0.0
        %509 = vmatprep.subr.mxu0 0.0
        %510 = vmatpush1.msra.mxu0 0.0
        %511 = vmatprep.subr.mxu0 0.0
        %512 = vmatpush1.msra.mxu0 0.0
        %513 = vmatprep.subr.mxu0 0.0
        %514 = vmatpush1.msra.mxu0 0.0
        %515 = vmatprep.subr.mxu0 0.0
        %516 = vmatpush1.msra.mxu0 0.0
        %517 = vmatprep.subr.mxu0 0.0
        %518 = vmatpush1.msra.mxu0 0.0
        %519 = vmatprep.subr.mxu0 0.0
        %520 = vmatpush1.msra.mxu0 0.0
        %521 = vmatprep.subr.mxu0 0.0
        %522 = vmatpush1.msra.mxu0 0.0
        %523 = vmatprep.subr.mxu0 0.0
        %524 = vmatpush1.msra.mxu0 0.0
        %525 = vmatprep.subr.mxu0 0.0
        %526 = vmatpush1.msra.mxu0 0.0
        %527 = vmatprep.subr.mxu0 0.0
        %528 = vmatpush1.msra.mxu0 0.0
        %529 = vmatprep.subr.mxu0 0.0
        %530 = vmatpush1.msra.mxu0 0.0
        %531 = vmatprep.subr.mxu0 0.0
        %532 = vmatpush1.msra.mxu0 0.0
        %533 = vmatprep.subr.mxu0 0.0
        %534 = vmatpush1.msra.mxu0 0.0
        %535 = vmatprep.subr.mxu0 0.0
        %536 = vmatpush1.msra.mxu0 0.0
        %537 = vmatprep.subr.mxu0 0.0
        %538 = vmatpush1.msra.mxu0 0.0
        %539 = vmatprep.subr.mxu0 0.0
        %540 = vmatpush1.msra.mxu0 0.0
        %541 = vmatprep.subr.mxu0 0.0
        %542 = vmatpush1.msra.mxu0 0.0
        %543 = vmatprep.subr.mxu0 0.0
        %544 = vmatpush1.msra.mxu0 0.0
        %545 = vmatprep.mubr.f32.mxu0 0.0
        %546 = vmatmul.mubr.f32.gmra.mrb[0].mxu0 %v479
        %v547 = vpop.f32.mrb[0].mxu0
        %v548 = vadd.f32 0.0, %v547
        %v549 = vpop.f32.mrb[0].mxu0
        %550 = vdwg.mxu0
        %v551 = vld [vmem:[%s4] sm:$0xff]
        %v552 = vld [vmem:[%s4 + $0x8] sm:$0xff]
        %v554 = vsel %vm366, %v474, 0
        %556 = vmatprep.subr.mxu0 0.0
        %557 = vmatpush1.msra.mxu0 %v551
        %558 = vmatprep.subr.mxu0 0.0
        %559 = vmatpush1.msra.mxu0 %v552
        %560 = vmatprep.subr.mxu0 0.0
        %561 = vmatpush1.msra.mxu0 0.0
        %562 = vmatprep.subr.mxu0 0.0
        %563 = vmatpush1.msra.mxu0 0.0
        %564 = vmatprep.subr.mxu0 0.0
        %565 = vmatpush1.msra.mxu0 0.0
        %566 = vmatprep.subr.mxu0 0.0
        %567 = vmatpush1.msra.mxu0 0.0
        %568 = vmatprep.subr.mxu0 0.0
        %569 = vmatpush1.msra.mxu0 0.0
        %570 = vmatprep.subr.mxu0 0.0
        %571 = vmatpush1.msra.mxu0 0.0
        %572 = vmatprep.subr.mxu0 0.0
        %573 = vmatpush1.msra.mxu0 0.0
        %574 = vmatprep.subr.mxu0 0.0
        %575 = vmatpush1.msra.mxu0 0.0
        %576 = vmatprep.subr.mxu0 0.0
        %577 = vmatpush1.msra.mxu0 0.0
        %578 = vmatprep.subr.mxu0 0.0
        %579 = vmatpush1.msra.mxu0 0.0
        %580 = vmatprep.subr.mxu0 0.0
        %581 = vmatpush1.msra.mxu0 0.0
        %582 = vmatprep.subr.mxu0 0.0
        %583 = vmatpush1.msra.mxu0 0.0
        %584 = vmatprep.subr.mxu0 0.0
        %585 = vmatpush1.msra.mxu0 0.0
        %586 = vmatprep.subr.mxu0 0.0
        %587 = vmatpush1.msra.mxu0 0.0
        %588 = vmatprep.subr.mxu0 0.0
        %589 = vmatpush1.msra.mxu0 0.0
        %590 = vmatprep.subr.mxu0 0.0
        %591 = vmatpush1.msra.mxu0 0.0
        %592 = vmatprep.subr.mxu0 0.0
        %593 = vmatpush1.msra.mxu0 0.0
        %594 = vmatprep.subr.mxu0 0.0
        %595 = vmatpush1.msra.mxu0 0.0
        %596 = vmatprep.subr.mxu0 0.0
        %597 = vmatpush1.msra.mxu0 0.0
        %598 = vmatprep.subr.mxu0 0.0
        %599 = vmatpush1.msra.mxu0 0.0
        %600 = vmatprep.subr.mxu0 0.0
        %601 = vmatpush1.msra.mxu0 0.0
        %602 = vmatprep.subr.mxu0 0.0
        %603 = vmatpush1.msra.mxu0 0.0
        %604 = vmatprep.subr.mxu0 0.0
        %605 = vmatpush1.msra.mxu0 0.0
        %606 = vmatprep.subr.mxu0 0.0
        %607 = vmatpush1.msra.mxu0 0.0
        %608 = vmatprep.subr.mxu0 0.0
        %609 = vmatpush1.msra.mxu0 0.0
        %610 = vmatprep.subr.mxu0 0.0
        %611 = vmatpush1.msra.mxu0 0.0
        %612 = vmatprep.subr.mxu0 0.0
        %613 = vmatpush1.msra.mxu0 0.0
        %614 = vmatprep.subr.mxu0 0.0
        %615 = vmatpush1.msra.mxu0 0.0
        %616 = vmatprep.subr.mxu0 0.0
        %617 = vmatpush1.msra.mxu0 0.0
        %618 = vmatprep.subr.mxu0 0.0
        %619 = vmatpush1.msra.mxu0 0.0
        %620 = vmatprep.mubr.f32.mxu0 0.0
        %621 = vmatmul.mubr.f32.gmra.mrb[0].mxu0 %v554
        %v622 = vpop.f32.mrb[0].mxu0
        %v623 = vadd.f32 0.0, %v622
        %v624 = vpop.f32.mrb[0].mxu0
        %625 = vdwg.mxu0
        %v626 = vrcp.pop %v623
        %v627 = vmul.f32 %v548, %v626
        %v628 = vsel %vm462, %v627, 0.0
        %v629 = vrot.slane %v628, 4
        %v630 = vadd.f32 %v628, %v629
        %v631 = vrot.slane %v630, 2
        %v632 = vadd.f32 %v630, %v631
        %v633 = vrot.slane %v632, 1
        %v634 = vadd.f32 %v632, %v633
        %vm635 = vcmask 8192
        %636 = vst.msk [vmem:[%s273] sm:$0x1] %vm635, %v469
        %637 = vst.msk [vmem:[%s279] sm:$0x1] %vm635, %v634
        %s638 = sand.u32 %s165, 1
        %s639 = scalar_lea.sflag [#allocation4], %s638
        %s640 = sand.u32 %s165, 1
        %s641 = scalar_lea.vmem [#allocation3], %s640
        %s642 = sand.u32 %s191, 1
        %s643 = scalar_lea.sflag [#allocation6], %s642
        %s644 = sand.u32 %s191, 1
        %s645 = scalar_lea.vmem [#allocation5], %s644
        // Predicated region
        $region45: #{tpu_custom_call.1} parent=43 // pred_check
          %p646 = pneg %p175
        $region46: #{tpu_custom_call.1} parent=43 // pred_check_branch
          %648 = sbr.rel (%p646) target = $region48
        $region47: #{tpu_custom_call.1} parent=43 // pred_region
          %s650 = ssub.s32 16, 16
          %651 = vsyncadd %s639, %s650
          %s652 = smul.addr %s26, 16
          %s653 = scalar_lea.hbm %s6, %s652
          %s655 = sshll.u32 %s641, 4
          %s656 = int_to_ptr.vmem [resolvable:$true] %s655
          %658 = dma.vmem_to_hbm [thread:$0]  %s656, 16, %s653, %s639
        $region48: #{tpu_custom_call.1} parent=43 // pred_fallthru
          _
        // Predicated region
        $region49: #{tpu_custom_call.1} parent=43 // pred_check
          %p659 = pneg %p201
        $region50: #{tpu_custom_call.1} parent=43 // pred_check_branch
          %661 = sbr.rel (%p659) target = $region52
        $region51: #{tpu_custom_call.1} parent=43 // pred_region
          %s663 = ssub.s32 16, 16
          %664 = vsyncadd %s643, %s663
          %s665 = smul.addr %s26, 16
          %s666 = scalar_lea.hbm %s7, %s665
          %s668 = sshll.u32 %s645, 4
          %s669 = int_to_ptr.vmem [resolvable:$true] %s668
          %671 = dma.vmem_to_hbm [thread:$0]  %s669, 16, %s666, %s643
        $region52: #{tpu_custom_call.1} parent=43 // pred_fallthru
          _
      $region44: #{tpu_custom_call.1} parent=5 // pred_fallthru
        _
      %p672 = scmp.le.s32.totalorder 2, %s21
      // Predicated region
      $region53: #{tpu_custom_call.1} parent=5 // pred_check
        %p673 = pneg %p672
      $region54: #{tpu_custom_call.1} parent=5 // pred_check_branch
        %675 = sbr.rel (%p673) target = $region56
      $region55: #{tpu_custom_call.1} parent=5 // pred_region
        %s676 = ssub.s32 %s21, 2
        // Predicated region
        $region57: #{tpu_custom_call.1} parent=55 // pred_check
          %p677 = pneg %p181
        $region58: #{tpu_custom_call.1} parent=55 // pred_check_branch
          %679 = sbr.rel (%p677) target = $region60
        $region59: #{tpu_custom_call.1} parent=55 // pred_region
          %s680 = sand.u32 %s166, 1
          %s681 = scalar_lea.sflag [#allocation4], %s680
          %s682 = sand.u32 %s166, 1
          %s683 = scalar_lea.vmem [#allocation3], %s682
          %684 = dma.done %s681, 16
        $region60: #{tpu_custom_call.1} parent=55 // pred_fallthru
          _
        // Predicated region
        $region61: #{tpu_custom_call.1} parent=55 // pred_check
          %p685 = pneg %p207
        $region62: #{tpu_custom_call.1} parent=55 // pred_check_branch
          %687 = sbr.rel (%p685) target = $region64
        $region63: #{tpu_custom_call.1} parent=55 // pred_region
          %s688 = sand.u32 %s192, 1
          %s689 = scalar_lea.sflag [#allocation6], %s688
          %s690 = sand.u32 %s192, 1
          %s691 = scalar_lea.vmem [#allocation5], %s690
          %692 = dma.done %s689, 16
        $region64: #{tpu_custom_call.1} parent=55 // pred_fallthru
          _
      $region56: #{tpu_custom_call.1} parent=5 // pred_fallthru
        _
    $region6: #{tpu_custom_call.1} parent=1 // loop_footer
      %s25 = sadd.s32 1, %s21
    $region7: #{tpu_custom_call.1} parent=1 // loop_footer_branch
      %20 = sbr.rel target = $region3
    $region8: #{tpu_custom_call.1} parent=1 // loop_exit
      _
    %693 = vsyncpa [#allocation4], 1
    %s694 = scalar_lea.sflag [#allocation4], 1
    %695 = vsyncpa %s694, 1
    %696 = vsyncpa [#allocation6], 1
    %s697 = scalar_lea.sflag [#allocation6], 1
    %698 = vsyncpa %s697, 1

</llo_original>
